<compile_context>
chip_gen: v6e
topology: v6e:2x2x1
jax: 0.10.0
libtpu: 0.0.40
codegen_flags: <defaults>
</compile_context>

<pallas_src>
import functools
import math

import jax
import jax.numpy as jnp
from jax import lax
from jax.experimental import pallas as pl
from jax.experimental.pallas import tpu as pltpu


# ---------------------------------------------------------------------------
# Device / VMEM helpers (generation-aware defaults, all guarded by fallbacks)
# ---------------------------------------------------------------------------
def _device_kind():
    try:
        return jax.devices()[0].device_kind.lower()
    except Exception:
        return ""


def _has_multiple_tensorcores(kind):
    # v4 / v5p (megacore) and v7x expose 2 TensorCores that a "parallel" grid
    # axis can shard across; the inference chips (v5e, v6e) have a single TC,
    # so extra grid steps there are pure per-step pipeline overhead.
    return any(tag in kind for tag in ("v4", "v5p", "v7", "7x"))


def _vmem_capacity_bytes(kind):
    try:
        return int(pltpu.get_tpu_info().vmem_capacity_bytes)
    except Exception:
        # v7x has 64 MiB per TensorCore; earlier generations 128 MiB.
        return (64 if ("v7" in kind or "7x" in kind) else 128) * 1024 * 1024


def _padded_tile_bytes(shape, itemsize):
    """VMEM footprint of one buffer, last two dims padded to (8, 128) tiles."""
    shape = tuple(int(s) for s in shape)
    if len(shape) == 1:
        shape = (1,) + shape
    lead = 1
    for s in shape[:-2]:
        lead *= s
    sub = -(-shape[-2] // 8) * 8
    lane = -(-shape[-1] // 128) * 128
    return lead * sub * lane * itemsize


def _estimate_vmem_bytes(bt, lq, lk, hq, hk, all_head, num_heads):
    """Rough per-grid-step VMEM footprint: double-buffered pipelined blocks
    plus in-kernel live intermediates (f32/bf16 Q, KV, scores, context)."""
    buf = 0
    buf += 2 * _padded_tile_bytes((bt, lq, hq), 2)          # xq block   (bf16)
    buf += 2 * _padded_tile_bytes((bt, lk, hk), 2)          # xk block   (bf16)
    buf += 2 * _padded_tile_bytes((bt, lq, lk), 2)          # mask block (bf16)
    buf += 2 * _padded_tile_bytes((bt, lq, all_head), 4)    # out block  (f32)
    buf += 2 * _padded_tile_bytes((hq, all_head), 2)        # Wq         (bf16)
    buf += 2 * _padded_tile_bytes((hk, 2 * all_head), 2)    # Wk|Wv      (bf16)
    buf += 2 * _padded_tile_bytes((1, 3 * all_head), 4)     # packed biases
    live = 0
    live += _padded_tile_bytes((bt * lq, all_head), 6)       # Q  (f32 + bf16)
    live += _padded_tile_bytes((bt * lk, 2 * all_head), 6)   # KV (f32 + bf16)
    live += num_heads * _padded_tile_bytes((lq, lk), 8)      # scores + probs
    live += _padded_tile_bytes((lq, all_head), 4)            # per-batch context
    return buf + live


def _pick_batch_block(B, lq, lk, hq, hk, all_head, num_heads, multi_tc, vmem_cap):
    budget = vmem_cap // 2            # headroom for compiler temps / spills
    divisors = [d for d in range(B, 0, -1) if B % d == 0]
    if multi_tc and B >= 2:
        # Keep >= 2 "parallel" grid steps so both TensorCores get work.
        preferred = [d for d in divisors if B // d >= 2]
        divisors = preferred + [d for d in divisors if d not in preferred]
    for d in divisors:
        if _estimate_vmem_bytes(d, lq, lk, hq, hk, all_head, num_heads) <= budget:
            return d
    return 1


# ---------------------------------------------------------------------------
# Kernel
# ---------------------------------------------------------------------------
def _cross_attention_kernel(xq_ref, xk_ref, mask_ref,
                            wq_ref, wkv_ref, bias_ref,
                            out_ref, *, num_heads, head_dim):
    bt, lq, hq = xq_ref.shape           # batch block, query len, query hidden
    _, lk, hk = xk_ref.shape            # key len, key hidden
    all_head = num_heads * head_dim

    # Flatten the batch block so each projection is one tall MXU matmul.
    # (Leading-dim merge only — cheap, layout-preserving reshape.)
    xq2 = xq_ref[...].reshape(bt * lq, hq)       # bf16 (cast in wrapper)
    xk2 = xk_ref[...].reshape(bt * lk, hk)       # bf16

    # Packed biases: [bq*scale | bk | bv], f32 (added post-accumulation).
    bq = bias_ref[:, :all_head]                  # (1, all_head)
    bkv = bias_ref[:, all_head:]                 # (1, 2*all_head)

    # QKV projections: bf16 operands, f32 accumulation.  Wq / bq already carry
    # the 1/sqrt(head_dim) factor (folded in wrapper); K and V are one fused
    # matmul against the concatenated Wk|Wv.
    q = jnp.dot(xq2, wq_ref[...], preferred_element_type=jnp.float32) + bq
    kv = jnp.dot(xk2, wkv_ref[...], preferred_element_type=jnp.float32) + bkv

    # Hoisted full-width casts for the attention matmuls.
    q_bf = q.astype(jnp.bfloat16)                        # (bt*lq, all_head)
    k_bf = kv[:, :all_head].astype(jnp.bfloat16)         # (bt*lk, all_head)
    v_bf = kv[:, all_head:].astype(jnp.bfloat16)         # (bt*lk, all_head)

    # Contract the last dims of both operands -> no explicit transpose (no XLU).
    dn = (((1,), (1,)), ((), ()))

    for b in range(bt):                          # static, small
        # Additive mask built per-batch from the 0/1 bf16 mask
        # (get_extended_attention_mask: 1 -> 0, 0 -> -10000).
        ext = (1.0 - mask_ref[b].astype(jnp.float32)) * (-10000.0)   # (lq, lk)
        q_b = q_bf[b * lq:(b + 1) * lq]
        k_b = k_bf[b * lk:(b + 1) * lk]
        v_b = v_bf[b * lk:(b + 1) * lk]
        heads = []
        for h in range(num_heads):               # static, small
            lo = h * head_dim
            qh = q_b[:, lo:lo + head_dim]        # (lq, d) bf16 (pre-scaled)
            kh = k_b[:, lo:lo + head_dim]        # (lk, d) bf16
            vh = v_b[:, lo:lo + head_dim]        # (lk, d) bf16

            s = lax.dot_general(qh, kh, dn,
                                preferred_element_type=jnp.float32) + ext
            s = s - jnp.max(s, axis=-1, keepdims=True)     # stable softmax
            p = jnp.exp(s)
            # approx=True: EUP reciprocal, ~1e-3 rel error; set False for
            # exact parity with the reference softmax.
            p = p * pl.reciprocal(jnp.sum(p, axis=-1, keepdims=True),
                                  approx=True)

            heads.append(jnp.dot(p.astype(jnp.bfloat16), vh,
                                 preferred_element_type=jnp.float32))
        # Per-batch store (keeps live ranges small as batch_block grows).
        out_ref[b] = jnp.concatenate(heads, axis=-1).astype(out_ref.dtype)


# ---------------------------------------------------------------------------
# Wrapper
# ---------------------------------------------------------------------------
def cross_attention(xq, xk, attention_mask, params, *, num_heads,
                    batch_block=None):
    """xq: [B, Lq, Hq], xk: [B, Lk, Hk], attention_mask: [B, Lq, Lk] (1/0)."""
    B, Lq, Hq = xq.shape
    _, Lk, Hk = xk.shape
    all_head = params["wq"].shape[0]
    head_dim = all_head // num_heads
    scale = 1.0 / math.sqrt(head_dim)

    kind = _device_kind()
    multi_tc = _has_multiple_tensorcores(kind)
    vmem_cap = _vmem_capacity_bytes(kind)

    if batch_block is None:
        batch_block = _pick_batch_block(B, Lq, Lk, Hq, Hk, all_head, num_heads,
                                        multi_tc, vmem_cap)
    assert B % batch_block == 0
    grid_b = B // batch_block

    est = _estimate_vmem_bytes(batch_block, Lq, Lk, Hq, Hk, all_head, num_heads)
    vmem_limit = int(min(int(0.9 * vmem_cap), max(32 * 1024 * 1024, 2 * est)))

    # Glue: pre-transpose weights to [in, out], cast to bf16 for the MXU,
    # fold the 1/sqrt(d_head) scale into Wq/bq, fuse Wk|Wv, pack biases.
    wq_t = (params["wq"].T * scale).astype(jnp.bfloat16)          # (Hq, AH)
    wkv_t = jnp.concatenate([params["wk"].T, params["wv"].T],
                            axis=1).astype(jnp.bfloat16)          # (Hk, 2*AH)
    bias = jnp.concatenate([params["bq"] * scale,
                            params["bk"],
                            params["bv"]]).reshape(1, 3 * all_head)
    bias = bias.astype(jnp.float32)

    # bf16 activations: halves the two largest DMAs; the kernel would round
    # to bf16 before the MXU anyway.  Mask shipped as bf16 (exact for 0/1).
    xq_bf = xq.astype(jnp.bfloat16)
    xk_bf = xk.astype(jnp.bfloat16)
    mask_bf = attention_mask.astype(jnp.bfloat16)

    kernel = functools.partial(_cross_attention_kernel,
                               num_heads=num_heads, head_dim=head_dim)

    return pl.pallas_call(
        kernel,
        out_shape=jax.ShapeDtypeStruct((B, Lq, all_head), jnp.float32),
        grid_spec=pltpu.PrefetchScalarGridSpec(
            num_scalar_prefetch=0,
            grid=(grid_b,),
            in_specs=[
                pl.BlockSpec((batch_block, Lq, Hq), lambda b: (b, 0, 0)),
                pl.BlockSpec((batch_block, Lk, Hk), lambda b: (b, 0, 0)),
                pl.BlockSpec((batch_block, Lq, Lk), lambda b: (b, 0, 0)),
                pl.BlockSpec(wq_t.shape, lambda b: (0, 0)),
                pl.BlockSpec(wkv_t.shape, lambda b: (0, 0)),
                pl.BlockSpec(bias.shape, lambda b: (0, 0)),
            ],
            out_specs=pl.BlockSpec((batch_block, Lq, all_head),
                                   lambda b: (b, 0, 0)),
        ),
        compiler_params=pltpu.CompilerParams(
            dimension_semantics=("parallel",),
            vmem_limit_bytes=vmem_limit),
    )(xq_bf, xk_bf, mask_bf, wq_t, wkv_t, bias)


# ---------------------------------------------------------------------------
# Plain-JAX f32 reference mirroring the PyTorch forward
# ---------------------------------------------------------------------------
def cross_attention_reference(xq, xk, attention_mask, params, *, num_heads):
    all_head = params["wq"].shape[0]
    head_dim = all_head // num_heads
    B, Lq, _ = xq.shape
    _, Lk, _ = xk.shape

    q = xq @ params["wq"].T + params["bq"]
    k = xk @ params["wk"].T + params["bk"]
    v = xk @ params["wv"].T + params["bv"]

    def split(x, L):
        return x.reshape(B, L, num_heads, head_dim).transpose(0, 2, 1, 3)

    qh, kh, vh = split(q, Lq), split(k, Lk), split(v, Lk)
    scores = jnp.einsum("bhqd,bhkd->bhqk", qh / math.sqrt(head_dim), kh)
    scores = scores + ((1.0 - attention_mask) * -10000.0)[:, None, :, :]
    probs = jax.nn.softmax(scores, axis=-1)
    ctx = jnp.einsum("bhqk,bhkd->bhqd", probs, vh)
    return ctx.transpose(0, 2, 1, 3).reshape(B, Lq, all_head)


if __name__ == "__main__":
    # Module config: hidden_size=32, num_attention_heads=2,
    # query_hidden_size=32, key_hidden_size=24.
    hidden_size = 32
    num_heads = 2
    query_hidden = 32
    key_hidden = 24
    all_head = hidden_size  # attention_head_size = hidden_size // num_heads

    B, Lq, Lk = 2, 8, 8

    key = jax.random.PRNGKey(0)
    ks = jax.random.split(key, 9)

    params = {
        "wq": jax.random.normal(ks[0], (all_head, query_hidden), jnp.float32) * 0.1,
        "bq": jax.random.normal(ks[1], (all_head,), jnp.float32) * 0.1,
        "wk": jax.random.normal(ks[2], (all_head, key_hidden), jnp.float32) * 0.1,
        "bk": jax.random.normal(ks[3], (all_head,), jnp.float32) * 0.1,
        "wv": jax.random.normal(ks[4], (all_head, key_hidden), jnp.float32) * 0.1,
        "bv": jax.random.normal(ks[5], (all_head,), jnp.float32) * 0.1,
    }

    xq = jax.random.normal(ks[6], (B, Lq, query_hidden), jnp.float32)
    xk = jax.random.normal(ks[7], (B, Lk, key_hidden), jnp.float32)
    # attention_mask: 1 = attend, 0 = masked; mask out last two keys of batch 1.
    attention_mask = jnp.ones((B, Lq, Lk), jnp.float32)
    attention_mask = attention_mask.at[1, :, Lk - 2:].set(0.0)

    out = cross_attention(xq, xk, attention_mask, params, num_heads=num_heads)
    out = jax.block_until_ready(out)

    ref = cross_attention_reference(xq, xk, attention_mask, params,
                                    num_heads=num_heads)
    assert out.shape == (B, Lq, all_head)
    # Tolerance accounts for bf16 MXU operands (f32 accumulation) and the
    # approximate EUP reciprocal in the softmax; both are ~1e-3 level here.
    assert jnp.allclose(out, ref, atol=2e-2, rtol=2e-2), "mismatch vs reference"

    print("KERNEL_OK")
</pallas_src>

<mosaic_0001>
module attributes {stable_mosaic.version = 11 : i64} {
  func.func @_cross_attention_kernel(%arg0: i32, %arg1: memref<2x8x32xbf16, #tpu.memory_space<vmem>>, %arg2: memref<2x8x24xbf16, #tpu.memory_space<vmem>>, %arg3: memref<2x8x8xbf16, #tpu.memory_space<vmem>>, %arg4: memref<32x32xbf16, #tpu.memory_space<vmem>>, %arg5: memref<24x64xbf16, #tpu.memory_space<vmem>>, %arg6: memref<1x96xf32, #tpu.memory_space<vmem>>, %arg7: memref<2x8x32xf32, #tpu.memory_space<vmem>>) attributes {dimension_semantics = [#tpu.dimension_semantics<parallel>], iteration_bounds = array<i64: 1>, scalar_prefetch = 0 : i64, scratch_operands = 0 : i64, tpu.core_type = #tpu.core_type<tc>, window_params = [{transform_indices = @transform_0, window_bounds = array<i64: 2, 8, 32>}, {transform_indices = @transform_1, window_bounds = array<i64: 2, 8, 24>}, {transform_indices = @transform_2, window_bounds = array<i64: 2, 8, 8>}, {pipeline_mode = #tpu.pipeline_mode<synchronous>, transform_indices = @transform_3, window_bounds = array<i64: 32, 32>}, {pipeline_mode = #tpu.pipeline_mode<synchronous>, transform_indices = @transform_4, window_bounds = array<i64: 24, 64>}, {pipeline_mode = #tpu.pipeline_mode<synchronous>, transform_indices = @transform_5, window_bounds = array<i64: 1, 96>}, {transform_indices = @transform_6, window_bounds = array<i64: 2, 8, 32>}]} {
    %c0 = arith.constant 0 : index
    %c0_0 = arith.constant 0 : index
    %c0_1 = arith.constant 0 : index
    %0 = vector.load %arg1[%c0, %c0_0, %c0_1] : memref<2x8x32xbf16, #tpu.memory_space<vmem>>, vector<2x8x32xbf16>
    %1 = vector.shape_cast %0 : vector<2x8x32xbf16> to vector<16x32xbf16>
    %c0_2 = arith.constant 0 : index
    %c0_3 = arith.constant 0 : index
    %c0_4 = arith.constant 0 : index
    %2 = vector.load %arg2[%c0_2, %c0_3, %c0_4] : memref<2x8x24xbf16, #tpu.memory_space<vmem>>, vector<2x8x24xbf16>
    %3 = vector.shape_cast %2 : vector<2x8x24xbf16> to vector<16x24xbf16>
    %c0_5 = arith.constant 0 : index
    %c0_6 = arith.constant 0 : index
    %4 = vector.load %arg6[%c0_5, %c0_6] : memref<1x96xf32, #tpu.memory_space<vmem>>, vector<1x32xf32>
    %c0_7 = arith.constant 0 : index
    %c32 = arith.constant 32 : index
    %5 = vector.load %arg6[%c0_7, %c32] : memref<1x96xf32, #tpu.memory_space<vmem>>, vector<1x64xf32>
    %c0_8 = arith.constant 0 : index
    %c0_9 = arith.constant 0 : index
    %6 = vector.load %arg4[%c0_8, %c0_9] : memref<32x32xbf16, #tpu.memory_space<vmem>>, vector<32x32xbf16>
    %cst = arith.constant dense<0.000000e+00> : vector<16x32xf32>
    %7 = tpu.matmul %1, %6, %cst {dimension_numbers = #tpu.dot_dimension_numbers<[1], [0], [0], [1], [0, 0, 1, 1], [], []>} : vector<16x32xbf16>, vector<32x32xbf16>, vector<16x32xf32> -> vector<16x32xf32>
    %8 = vector.broadcast %4 : vector<1x32xf32> to vector<16x32xf32>
    %9 = arith.addf %7, %8 : vector<16x32xf32>
    %c0_10 = arith.constant 0 : index
    %c0_11 = arith.constant 0 : index
    %10 = vector.load %arg5[%c0_10, %c0_11] : memref<24x64xbf16, #tpu.memory_space<vmem>>, vector<24x64xbf16>
    %cst_12 = arith.constant dense<0.000000e+00> : vector<16x64xf32>
    %11 = tpu.matmul %3, %10, %cst_12 {dimension_numbers = #tpu.dot_dimension_numbers<[1], [0], [0], [1], [0, 0, 1, 1], [], []>} : vector<16x24xbf16>, vector<24x64xbf16>, vector<16x64xf32> -> vector<16x64xf32>
    %12 = vector.broadcast %5 : vector<1x64xf32> to vector<16x64xf32>
    %13 = arith.addf %11, %12 : vector<16x64xf32>
    %14 = arith.truncf %9 : vector<16x32xf32> to vector<16x32xbf16>
    %15 = vector.extract_strided_slice %13 {offsets = [0, 0], sizes = [16, 32], strides = [1, 1]} : vector<16x64xf32> to vector<16x32xf32>
    %16 = arith.truncf %15 : vector<16x32xf32> to vector<16x32xbf16>
    %17 = vector.extract_strided_slice %13 {offsets = [0, 32], sizes = [16, 32], strides = [1, 1]} : vector<16x64xf32> to vector<16x32xf32>
    %18 = arith.truncf %17 : vector<16x32xf32> to vector<16x32xbf16>
    %c0_13 = arith.constant 0 : index
    %c0_14 = arith.constant 0 : index
    %c0_15 = arith.constant 0 : index
    %19 = vector.load %arg3[%c0_13, %c0_14, %c0_15] : memref<2x8x8xbf16, #tpu.memory_space<vmem>>, vector<1x8x8xbf16>
    %20 = vector.shape_cast %19 : vector<1x8x8xbf16> to vector<8x8xbf16>
    %21 = arith.extf %20 : vector<8x8xbf16> to vector<8x8xf32>
    %cst_16 = arith.constant 1.000000e+00 : f32
    %22 = vector.broadcast %cst_16 : f32 to vector<8x8xf32>
    %23 = arith.subf %22, %21 : vector<8x8xf32>
    %cst_17 = arith.constant -1.000000e+04 : f32
    %24 = vector.broadcast %cst_17 : f32 to vector<8x8xf32>
    %25 = arith.mulf %23, %24 : vector<8x8xf32>
    %26 = vector.extract_strided_slice %14 {offsets = [0, 0], sizes = [8, 32], strides = [1, 1]} : vector<16x32xbf16> to vector<8x32xbf16>
    %27 = vector.extract_strided_slice %16 {offsets = [0, 0], sizes = [8, 32], strides = [1, 1]} : vector<16x32xbf16> to vector<8x32xbf16>
    %28 = vector.extract_strided_slice %18 {offsets = [0, 0], sizes = [8, 32], strides = [1, 1]} : vector<16x32xbf16> to vector<8x32xbf16>
    %29 = vector.extract_strided_slice %26 {offsets = [0, 0], sizes = [8, 16], strides = [1, 1]} : vector<8x32xbf16> to vector<8x16xbf16>
    %30 = vector.extract_strided_slice %27 {offsets = [0, 0], sizes = [8, 16], strides = [1, 1]} : vector<8x32xbf16> to vector<8x16xbf16>
    %31 = vector.extract_strided_slice %28 {offsets = [0, 0], sizes = [8, 16], strides = [1, 1]} : vector<8x32xbf16> to vector<8x16xbf16>
    %cst_18 = arith.constant dense<0.000000e+00> : vector<8x8xf32>
    %32 = tpu.matmul %29, %30, %cst_18 {dimension_numbers = #tpu.dot_dimension_numbers<[1], [1], [0], [0], [0, 0, 1, 0], [], []>} : vector<8x16xbf16>, vector<8x16xbf16>, vector<8x8xf32> -> vector<8x8xf32>
    %33 = arith.addf %32, %25 : vector<8x8xf32>
    %cst_19 = arith.constant dense<0xFF800000> : vector<8xf32>
    %34 = vector.multi_reduction <maximumf>, %33, %cst_19 [1] : vector<8x8xf32> to vector<8xf32>
    %35 = vector.shape_cast %34 : vector<8xf32> to vector<8x1xf32>
    %36 = vector.broadcast %35 : vector<8x1xf32> to vector<8x8xf32>
    %37 = arith.subf %33, %36 : vector<8x8xf32>
    %38 = math.exp %37 : vector<8x8xf32>
    %cst_20 = arith.constant dense<0.000000e+00> : vector<8xf32>
    %39 = vector.multi_reduction <add>, %38, %cst_20 [1] : vector<8x8xf32> to vector<8xf32>
    %40 = vector.shape_cast %39 : vector<8xf32> to vector<8x1xf32>
    %41 = tpu.reciprocal %40 {approx = true} : vector<8x1xf32> -> vector<8x1xf32>
    %42 = vector.broadcast %41 : vector<8x1xf32> to vector<8x8xf32>
    %43 = arith.mulf %38, %42 : vector<8x8xf32>
    %44 = arith.truncf %43 : vector<8x8xf32> to vector<8x8xbf16>
    %cst_21 = arith.constant dense<0.000000e+00> : vector<8x16xf32>
    %45 = tpu.matmul %44, %31, %cst_21 {dimension_numbers = #tpu.dot_dimension_numbers<[1], [0], [0], [1], [0, 0, 1, 1], [], []>} : vector<8x8xbf16>, vector<8x16xbf16>, vector<8x16xf32> -> vector<8x16xf32>
    %46 = vector.extract_strided_slice %26 {offsets = [0, 16], sizes = [8, 16], strides = [1, 1]} : vector<8x32xbf16> to vector<8x16xbf16>
    %47 = vector.extract_strided_slice %27 {offsets = [0, 16], sizes = [8, 16], strides = [1, 1]} : vector<8x32xbf16> to vector<8x16xbf16>
    %48 = vector.extract_strided_slice %28 {offsets = [0, 16], sizes = [8, 16], strides = [1, 1]} : vector<8x32xbf16> to vector<8x16xbf16>
    %cst_22 = arith.constant dense<0.000000e+00> : vector<8x8xf32>
    %49 = tpu.matmul %46, %47, %cst_22 {dimension_numbers = #tpu.dot_dimension_numbers<[1], [1], [0], [0], [0, 0, 1, 0], [], []>} : vector<8x16xbf16>, vector<8x16xbf16>, vector<8x8xf32> -> vector<8x8xf32>
    %50 = arith.addf %49, %25 : vector<8x8xf32>
    %cst_23 = arith.constant dense<0xFF800000> : vector<8xf32>
    %51 = vector.multi_reduction <maximumf>, %50, %cst_23 [1] : vector<8x8xf32> to vector<8xf32>
    %52 = vector.shape_cast %51 : vector<8xf32> to vector<8x1xf32>
    %53 = vector.broadcast %52 : vector<8x1xf32> to vector<8x8xf32>
    %54 = arith.subf %50, %53 : vector<8x8xf32>
    %55 = math.exp %54 : vector<8x8xf32>
    %cst_24 = arith.constant dense<0.000000e+00> : vector<8xf32>
    %56 = vector.multi_reduction <add>, %55, %cst_24 [1] : vector<8x8xf32> to vector<8xf32>
    %57 = vector.shape_cast %56 : vector<8xf32> to vector<8x1xf32>
    %58 = tpu.reciprocal %57 {approx = true} : vector<8x1xf32> -> vector<8x1xf32>
    %59 = vector.broadcast %58 : vector<8x1xf32> to vector<8x8xf32>
    %60 = arith.mulf %55, %59 : vector<8x8xf32>
    %61 = arith.truncf %60 : vector<8x8xf32> to vector<8x8xbf16>
    %cst_25 = arith.constant dense<0.000000e+00> : vector<8x16xf32>
    %62 = tpu.matmul %61, %48, %cst_25 {dimension_numbers = #tpu.dot_dimension_numbers<[1], [0], [0], [1], [0, 0, 1, 1], [], []>} : vector<8x8xbf16>, vector<8x16xbf16>, vector<8x16xf32> -> vector<8x16xf32>
    %63 = tpu.concatenate %45, %62 in 1 : vector<8x16xf32>, vector<8x16xf32> -> vector<8x32xf32>
    %c0_26 = arith.constant 0 : index
    %c0_27 = arith.constant 0 : index
    %c0_28 = arith.constant 0 : index
    %64 = vector.load %arg7[%c0_26, %c0_27, %c0_28] : memref<2x8x32xf32, #tpu.memory_space<vmem>>, vector<1x8x32xf32>
    %65 = vector.shape_cast %64 : vector<1x8x32xf32> to vector<8x32xf32>
    %66 = vector.shape_cast %63 : vector<8x32xf32> to vector<1x8x32xf32>
    tpu.vector_store %arg7[%c0_26, %c0_27, %c0_28], %66 {strides = array<i32>} : memref<2x8x32xf32, #tpu.memory_space<vmem>>, vector<1x8x32xf32>,
    %c1 = arith.constant 1 : index
    %c0_29 = arith.constant 0 : index
    %c0_30 = arith.constant 0 : index
    %67 = vector.load %arg3[%c1, %c0_29, %c0_30] : memref<2x8x8xbf16, #tpu.memory_space<vmem>>, vector<1x8x8xbf16>
    %68 = vector.shape_cast %67 : vector<1x8x8xbf16> to vector<8x8xbf16>
    %69 = arith.extf %68 : vector<8x8xbf16> to vector<8x8xf32>
    %cst_31 = arith.constant 1.000000e+00 : f32
    %70 = vector.broadcast %cst_31 : f32 to vector<8x8xf32>
    %71 = arith.subf %70, %69 : vector<8x8xf32>
    %cst_32 = arith.constant -1.000000e+04 : f32
    %72 = vector.broadcast %cst_32 : f32 to vector<8x8xf32>
    %73 = arith.mulf %71, %72 : vector<8x8xf32>
    %74 = vector.extract_strided_slice %14 {offsets = [8, 0], sizes = [8, 32], strides = [1, 1]} : vector<16x32xbf16> to vector<8x32xbf16>
    %75 = vector.extract_strided_slice %16 {offsets = [8, 0], sizes = [8, 32], strides = [1, 1]} : vector<16x32xbf16> to vector<8x32xbf16>
    %76 = vector.extract_strided_slice %18 {offsets = [8, 0], sizes = [8, 32], strides = [1, 1]} : vector<16x32xbf16> to vector<8x32xbf16>
    %77 = vector.extract_strided_slice %74 {offsets = [0, 0], sizes = [8, 16], strides = [1, 1]} : vector<8x32xbf16> to vector<8x16xbf16>
    %78 = vector.extract_strided_slice %75 {offsets = [0, 0], sizes = [8, 16], strides = [1, 1]} : vector<8x32xbf16> to vector<8x16xbf16>
    %79 = vector.extract_strided_slice %76 {offsets = [0, 0], sizes = [8, 16], strides = [1, 1]} : vector<8x32xbf16> to vector<8x16xbf16>
    %cst_33 = arith.constant dense<0.000000e+00> : vector<8x8xf32>
    %80 = tpu.matmul %77, %78, %cst_33 {dimension_numbers = #tpu.dot_dimension_numbers<[1], [1], [0], [0], [0, 0, 1, 0], [], []>} : vector<8x16xbf16>, vector<8x16xbf16>, vector<8x8xf32> -> vector<8x8xf32>
    %81 = arith.addf %80, %73 : vector<8x8xf32>
    %cst_34 = arith.constant dense<0xFF800000> : vector<8xf32>
    %82 = vector.multi_reduction <maximumf>, %81, %cst_34 [1] : vector<8x8xf32> to vector<8xf32>
    %83 = vector.shape_cast %82 : vector<8xf32> to vector<8x1xf32>
    %84 = vector.broadcast %83 : vector<8x1xf32> to vector<8x8xf32>
    %85 = arith.subf %81, %84 : vector<8x8xf32>
    %86 = math.exp %85 : vector<8x8xf32>
    %cst_35 = arith.constant dense<0.000000e+00> : vector<8xf32>
    %87 = vector.multi_reduction <add>, %86, %cst_35 [1] : vector<8x8xf32> to vector<8xf32>
    %88 = vector.shape_cast %87 : vector<8xf32> to vector<8x1xf32>
    %89 = tpu.reciprocal %88 {approx = true} : vector<8x1xf32> -> vector<8x1xf32>
    %90 = vector.broadcast %89 : vector<8x1xf32> to vector<8x8xf32>
    %91 = arith.mulf %86, %90 : vector<8x8xf32>
    %92 = arith.truncf %91 : vector<8x8xf32> to vector<8x8xbf16>
    %cst_36 = arith.constant dense<0.000000e+00> : vector<8x16xf32>
    %93 = tpu.matmul %92, %79, %cst_36 {dimension_numbers = #tpu.dot_dimension_numbers<[1], [0], [0], [1], [0, 0, 1, 1], [], []>} : vector<8x8xbf16>, vector<8x16xbf16>, vector<8x16xf32> -> vector<8x16xf32>
    %94 = vector.extract_strided_slice %74 {offsets = [0, 16], sizes = [8, 16], strides = [1, 1]} : vector<8x32xbf16> to vector<8x16xbf16>
    %95 = vector.extract_strided_slice %75 {offsets = [0, 16], sizes = [8, 16], strides = [1, 1]} : vector<8x32xbf16> to vector<8x16xbf16>
    %96 = vector.extract_strided_slice %76 {offsets = [0, 16], sizes = [8, 16], strides = [1, 1]} : vector<8x32xbf16> to vector<8x16xbf16>
    %cst_37 = arith.constant dense<0.000000e+00> : vector<8x8xf32>
    %97 = tpu.matmul %94, %95, %cst_37 {dimension_numbers = #tpu.dot_dimension_numbers<[1], [1], [0], [0], [0, 0, 1, 0], [], []>} : vector<8x16xbf16>, vector<8x16xbf16>, vector<8x8xf32> -> vector<8x8xf32>
    %98 = arith.addf %97, %73 : vector<8x8xf32>
    %cst_38 = arith.constant dense<0xFF800000> : vector<8xf32>
    %99 = vector.multi_reduction <maximumf>, %98, %cst_38 [1] : vector<8x8xf32> to vector<8xf32>
    %100 = vector.shape_cast %99 : vector<8xf32> to vector<8x1xf32>
    %101 = vector.broadcast %100 : vector<8x1xf32> to vector<8x8xf32>
    %102 = arith.subf %98, %101 : vector<8x8xf32>
    %103 = math.exp %102 : vector<8x8xf32>
    %cst_39 = arith.constant dense<0.000000e+00> : vector<8xf32>
    %104 = vector.multi_reduction <add>, %103, %cst_39 [1] : vector<8x8xf32> to vector<8xf32>
    %105 = vector.shape_cast %104 : vector<8xf32> to vector<8x1xf32>
    %106 = tpu.reciprocal %105 {approx = true} : vector<8x1xf32> -> vector<8x1xf32>
    %107 = vector.broadcast %106 : vector<8x1xf32> to vector<8x8xf32>
    %108 = arith.mulf %103, %107 : vector<8x8xf32>
    %109 = arith.truncf %108 : vector<8x8xf32> to vector<8x8xbf16>
    %cst_40 = arith.constant dense<0.000000e+00> : vector<8x16xf32>
    %110 = tpu.matmul %109, %96, %cst_40 {dimension_numbers = #tpu.dot_dimension_numbers<[1], [0], [0], [1], [0, 0, 1, 1], [], []>} : vector<8x8xbf16>, vector<8x16xbf16>, vector<8x16xf32> -> vector<8x16xf32>
    %111 = tpu.concatenate %93, %110 in 1 : vector<8x16xf32>, vector<8x16xf32> -> vector<8x32xf32>
    %c1_41 = arith.constant 1 : index
    %c0_42 = arith.constant 0 : index
    %c0_43 = arith.constant 0 : index
    %112 = vector.load %arg7[%c1_41, %c0_42, %c0_43] : memref<2x8x32xf32, #tpu.memory_space<vmem>>, vector<1x8x32xf32>
    %113 = vector.shape_cast %112 : vector<1x8x32xf32> to vector<8x32xf32>
    %114 = vector.shape_cast %111 : vector<8x32xf32> to vector<1x8x32xf32>
    tpu.vector_store %arg7[%c1_41, %c0_42, %c0_43], %114 {strides = array<i32>} : memref<2x8x32xf32, #tpu.memory_space<vmem>>, vector<1x8x32xf32>,
    return
  }
  func.func @transform_0(%arg0: i32) -> (i32, i32, i32) {
    %c0_i32 = arith.constant 0 : i32
    %c0_i32_0 = arith.constant 0 : i32
    %c0_i32_1 = arith.constant 0 : i32
    return %arg0, %c0_i32, %c0_i32_0 : i32, i32, i32
  }
  func.func @transform_1(%arg0: i32) -> (i32, i32, i32) {
    %c0_i32 = arith.constant 0 : i32
    %c0_i32_0 = arith.constant 0 : i32
    %c0_i32_1 = arith.constant 0 : i32
    return %arg0, %c0_i32, %c0_i32_0 : i32, i32, i32
  }
  func.func @transform_2(%arg0: i32) -> (i32, i32, i32) {
    %c0_i32 = arith.constant 0 : i32
    %c0_i32_0 = arith.constant 0 : i32
    %c0_i32_1 = arith.constant 0 : i32
    return %arg0, %c0_i32, %c0_i32_0 : i32, i32, i32
  }
  func.func @transform_3(%arg0: i32) -> (i32, i32) {
    %c0_i32 = arith.constant 0 : i32
    %c0_i32_0 = arith.constant 0 : i32
    %c0_i32_1 = arith.constant 0 : i32
    return %c0_i32, %c0_i32_0 : i32, i32
  }
  func.func @transform_4(%arg0: i32) -> (i32, i32) {
    %c0_i32 = arith.constant 0 : i32
    %c0_i32_0 = arith.constant 0 : i32
    %c0_i32_1 = arith.constant 0 : i32
    return %c0_i32, %c0_i32_0 : i32, i32
  }
  func.func @transform_5(%arg0: i32) -> (i32, i32) {
    %c0_i32 = arith.constant 0 : i32
    %c0_i32_0 = arith.constant 0 : i32
    %c0_i32_1 = arith.constant 0 : i32
    return %c0_i32, %c0_i32_0 : i32, i32
  }
  func.func @transform_6(%arg0: i32) -> (i32, i32, i32) {
    %c0_i32 = arith.constant 0 : i32
    %c0_i32_0 = arith.constant 0 : i32
    %c0_i32_1 = arith.constant 0 : i32
    return %arg0, %c0_i32, %c0_i32_0 : i32, i32, i32
  }
}

</mosaic_0001>

<llo_original>
// kernel: tpu_custom_call.1
$region0: #{tpu_custom_call.1}
  #allocation0 [shape = 'u32[]', space=smem, size = 0x4, offset = 0x4, fixed_abs, tag = 'smem constant byte address 0x4 - core index']
  #allocation1 [shape = 'u32[144,128]{1,0:T(1,128)}', space=vmem, size = 0x12000, scoped, tag = 'internal scratch']
  %s0 = inlined_call_operand.hbm [shape: bf16[2,8,32], index: 0, kind: input, shape index: {}]
  %s1 = inlined_call_operand.hbm [shape: bf16[2,8,24], index: 1, kind: input, shape index: {}]
  %s2 = inlined_call_operand.hbm [shape: bf16[2,8,8], index: 2, kind: input, shape index: {}]
  %s3 = inlined_call_operand.hbm [shape: bf16[32,32], index: 3, kind: input, shape index: {}]
  %s4 = inlined_call_operand.hbm [shape: bf16[24,64], index: 4, kind: input, shape index: {}]
  %s5 = inlined_call_operand.vmem [shape: f32[1,96], index: 5, kind: input, shape index: {}]
  %s6 = inlined_call_operand.hbm [shape: f32[2,8,32], index: 6, kind: output, shape index: {}]
  %s7 = sld [smem:[#allocation0]]
  $region54: #{tpu_custom_call.1} parent=0
    _
  %s9 = ssub.s32 1, %s7
  %s10 = scalar_select 0, %s9, %s7
  $region1: #{tpu_custom_call.1} parent=0
    #allocation2 [shape = 'u8[4096]{0}', space=vmem, size = 0x1000, scoped, tag = 'input window, operand 0, single buffered']
    #allocation3 [shape = 's32[1]{0}', space=sflag, size = 0x4, scoped, tag = 'scoped memory for tpu_custom_call.1']
    #allocation4 [shape = 's32[1]{0}', space=sflag, size = 0x4, scoped, tag = 'scoped memory for tpu_custom_call.1']
    #allocation5 [shape = 'u8[4096]{0}', space=vmem, size = 0x1000, scoped, tag = 'input window, operand 1, single buffered']
    #allocation6 [shape = 's32[1]{0}', space=sflag, size = 0x4, scoped, tag = 'scoped memory for tpu_custom_call.1']
    #allocation7 [shape = 'u8[4096]{0}', space=vmem, size = 0x1000, scoped, tag = 'input window, operand 2, single buffered']
    #allocation8 [shape = 'u8[8192]{0}', space=vmem, size = 0x2000, scoped, tag = 'input window, operand 3, single buffered']
    #allocation9 [shape = 's32[1]{0}', space=sflag, size = 0x4, scoped, tag = 'scoped memory for tpu_custom_call.1']
    #allocation10 [shape = 'u8[6144]{0}', space=vmem, size = 0x1800, scoped, tag = 'input window, operand 4, single buffered']
    #allocation11 [shape = 'u8[8192]{0}', space=vmem, size = 0x2000, scoped, tag = 'output window, operand 0, single buffered']
    %11 = vsyncpa [#allocation3], 0
    %12 = vsyncpa [#allocation6], 0
    %13 = vsyncpa [#allocation9], 0
    %14 = vsyncpa [#allocation4], 0
    // Predicated region
    $region2: #{tpu_custom_call.1} parent=1 // pred_check
      _
    $region3: #{tpu_custom_call.1} parent=1 // pred_check_branch
      %16 = sbr.rel (0) target = $region5
    $region4: #{tpu_custom_call.1} parent=1 // pred_region
      %s18 = ssub.s32 128, 128
      %19 = vsyncadd [#allocation3], %s18
      %s20 = sshll.u32 [#allocation2], 4
      %s21 = int_to_ptr.vmem [resolvable:$true] %s20
      %26 = dma.hbm_to_vmem [thread:$0]  %s0, 128, %s21, [#allocation3], 64, 64, 4
    $region5: #{tpu_custom_call.1} parent=1 // pred_fallthru
      _
    // Predicated region
    $region6: #{tpu_custom_call.1} parent=1 // pred_check
      _
    $region7: #{tpu_custom_call.1} parent=1 // pred_check_branch
      %28 = sbr.rel (0) target = $region9
    $region8: #{tpu_custom_call.1} parent=1 // pred_region
      %s30 = ssub.s32 128, 128
      %31 = vsyncadd [#allocation6], %s30
      %s32 = sshll.u32 [#allocation5], 4
      %s33 = int_to_ptr.vmem [resolvable:$true] %s32
      %38 = dma.hbm_to_vmem [thread:$0]  %s1, 128, %s33, [#allocation6], 64, 64, 4
    $region9: #{tpu_custom_call.1} parent=1 // pred_fallthru
      _
    // Predicated region
    $region10: #{tpu_custom_call.1} parent=1 // pred_check
      _
    $region11: #{tpu_custom_call.1} parent=1 // pred_check_branch
      %40 = sbr.rel (0) target = $region13
    $region12: #{tpu_custom_call.1} parent=1 // pred_region
      %s42 = ssub.s32 128, 128
      %43 = vsyncadd [#allocation6], %s42
      %s44 = sshll.u32 [#allocation7], 4
      %s45 = int_to_ptr.vmem [resolvable:$true] %s44
      %50 = dma.hbm_to_vmem [thread:$0]  %s2, 128, %s45, [#allocation6], 64, 64, 4
    $region13: #{tpu_custom_call.1} parent=1 // pred_fallthru
      _
    // Predicated region
    $region14: #{tpu_custom_call.1} parent=1 // pred_check
      _
    $region15: #{tpu_custom_call.1} parent=1 // pred_check_branch
      %52 = sbr.rel (0) target = $region17
    $region16: #{tpu_custom_call.1} parent=1 // pred_region
      %s54 = ssub.s32 256, 256
      %55 = vsyncadd [#allocation9], %s54
      %s56 = sshll.u32 [#allocation8], 4
      %s57 = int_to_ptr.vmem [resolvable:$true] %s56
      %62 = dma.hbm_to_vmem [thread:$0]  %s3, 256, %s57, [#allocation9], 64, 64, 4
    $region17: #{tpu_custom_call.1} parent=1 // pred_fallthru
      _
    // Predicated region
    $region18: #{tpu_custom_call.1} parent=1 // pred_check
      _
    $region19: #{tpu_custom_call.1} parent=1 // pred_check_branch
      %64 = sbr.rel (0) target = $region21
    $region20: #{tpu_custom_call.1} parent=1 // pred_region
      %s66 = ssub.s32 192, 192
      %67 = vsyncadd [#allocation9], %s66
      %s68 = sshll.u32 [#allocation10], 4
      %s69 = int_to_ptr.vmem [resolvable:$true] %s68
      %74 = dma.hbm_to_vmem [thread:$0]  %s4, 192, %s69, [#allocation9], 64, 64, 4
    $region21: #{tpu_custom_call.1} parent=1 // pred_fallthru
      _
    // Predicated region
    $region22: #{tpu_custom_call.1} parent=1 // pred_check
      _
    $region23: #{tpu_custom_call.1} parent=1 // pred_check_branch
      %76 = sbr.rel (0) target = $region25
    $region24: #{tpu_custom_call.1} parent=1 // pred_region
      _
    $region25: #{tpu_custom_call.1} parent=1 // pred_fallthru
      _
    // Predicated region
    $region26: #{tpu_custom_call.1} parent=1 // pred_check
      _
    $region27: #{tpu_custom_call.1} parent=1 // pred_check_branch
      %78 = sbr.rel (0) target = $region29
    $region28: #{tpu_custom_call.1} parent=1 // pred_region
      %79 = dma.done [#allocation3], 128
    $region29: #{tpu_custom_call.1} parent=1 // pred_fallthru
      _
    // Predicated region
    $region30: #{tpu_custom_call.1} parent=1 // pred_check
      _
    $region31: #{tpu_custom_call.1} parent=1 // pred_check_branch
      %81 = sbr.rel (0) target = $region33
    $region32: #{tpu_custom_call.1} parent=1 // pred_region
      %82 = dma.done [#allocation6], 128
    $region33: #{tpu_custom_call.1} parent=1 // pred_fallthru
      _
    // Predicated region
    $region34: #{tpu_custom_call.1} parent=1 // pred_check
      _
    $region35: #{tpu_custom_call.1} parent=1 // pred_check_branch
      %84 = sbr.rel (0) target = $region37
    $region36: #{tpu_custom_call.1} parent=1 // pred_region
      %85 = dma.done [#allocation6], 128
    $region37: #{tpu_custom_call.1} parent=1 // pred_fallthru
      _
    // Predicated region
    $region38: #{tpu_custom_call.1} parent=1 // pred_check
      _
    $region39: #{tpu_custom_call.1} parent=1 // pred_check_branch
      %87 = sbr.rel (0) target = $region41
    $region40: #{tpu_custom_call.1} parent=1 // pred_region
      %88 = dma.done [#allocation9], 256
    $region41: #{tpu_custom_call.1} parent=1 // pred_fallthru
      _
    // Predicated region
    $region42: #{tpu_custom_call.1} parent=1 // pred_check
      _
    $region43: #{tpu_custom_call.1} parent=1 // pred_check_branch
      %90 = sbr.rel (0) target = $region45
    $region44: #{tpu_custom_call.1} parent=1 // pred_region
      %91 = dma.done [#allocation9], 192
    $region45: #{tpu_custom_call.1} parent=1 // pred_fallthru
      _
    %v93 = vld [vmem:[#allocation2] sm:$0xf]
    %v94 = vld [vmem:[#allocation2 + $0x4] sm:$0xf]
    %v95 = vld [vmem:[#allocation5] sm:$0xf]
    %v96 = vld [vmem:[#allocation5 + $0x4] sm:$0xf]
    %v97 = vld [vmem:[%s5] sm:$0x1]
    %v98 = vld [vmem:[#allocation8] sm:$0xf]
    %v99 = vld [vmem:[#allocation8 + $0x4] sm:$0xf]
    %v100 = vld [vmem:[#allocation8 + $0x8] sm:$0xf]
    %v101 = vld [vmem:[#allocation8 + $0xc] sm:$0xf]
    %v103 = vlaneseq
    %v104 = vshrl.u32 %v103, 7
    %v105 = vsub.s32 0, %v104
    %v106 = vrot.slane %v97, %v105
    %v110 = vunpack.c.l.b16 %v93
    %v111 = vunpack.c.l.b16 %v94
    %v112 = vpack.c.b16 %v111, %v110
    %v117 = vunpack.c.l.b16 %v98
    %v118 = vunpack.c.l.b16 %v99
    %v119 = vunpack.c.l.b16 %v100
    %v120 = vunpack.c.l.b16 %v101
    %v121 = vpack.c.b16 %v118, %v117
    %v122 = vpack.c.b16 %v120, %v119
    %vm125 = vcmask 261120
    %v127 = vsel %vm125, %v112, 0
    %129 = vmatprep.subr.bf16.mxu0 0
    %130 = vmatpush1.bf16.msra.mxu0 0
    %131 = vmatprep.subr.bf16.mxu0 0
    %132 = vmatpush1.bf16.msra.mxu0 0
    %133 = vmatprep.subr.bf16.mxu0 0
    %134 = vmatpush1.bf16.msra.mxu0 0
    %135 = vmatprep.subr.bf16.mxu0 0
    %136 = vmatpush1.bf16.msra.mxu0 0
    %137 = vmatprep.subr.bf16.mxu0 0
    %138 = vmatpush1.bf16.msra.mxu0 0
    %139 = vmatprep.subr.bf16.mxu0 0
    %140 = vmatpush1.bf16.msra.mxu0 0
    %141 = vmatprep.subr.bf16.mxu0 0
    %142 = vmatpush1.bf16.msra.mxu0 %v122
    %143 = vmatprep.subr.bf16.mxu0 0
    %144 = vmatpush1.bf16.msra.mxu0 %v121
    %145 = vmatprep.subr.bf16.mxu0 0
    %146 = vmatpush2.bf16.msra.mxu0 0
    %147 = vmatprep.subr.bf16.mxu0 0
    %148 = vmatpush2.bf16.msra.mxu0 0
    %149 = vmatprep.subr.bf16.mxu0 0
    %150 = vmatpush2.bf16.msra.mxu0 0
    %151 = vmatprep.subr.bf16.mxu0 0
    %152 = vmatpush2.bf16.msra.mxu0 0
    %153 = vmatprep.subr.bf16.mxu0 0
    %154 = vmatpush2.bf16.msra.mxu0 0
    %155 = vmatprep.subr.bf16.mxu0 0
    %156 = vmatpush2.bf16.msra.mxu0 0
    %157 = vmatprep.subr.bf16.mxu0 0
    %158 = vmatpush2.bf16.msra.mxu0 0
    %159 = vmatprep.subr.bf16.mxu0 0
    %160 = vmatpush2.bf16.msra.mxu0 0
    %161 = vmatprep.mubr.bf16.mxu0 0
    %162 = vmatmul.mubr.bf16.gmra.mxu0 %v127
    %v163 = vpop.f32.mrf.mxu0
    %v164 = vadd.f32 %v106, %v163
    %v165 = vpop.f32.mrf.mxu0
    %v166 = vpop.f32.mrf.mxu0
    %v167 = vadd.f32 %v106, %v166
    %v168 = vpop.f32.mrf.mxu0
    %169 = vdwg.mxu0
    %v170 = vld [vmem:[#allocation10] sm:$0xf]
    %v171 = vld [vmem:[#allocation10 + $0x4] sm:$0xf]
    %v172 = vld [vmem:[#allocation10 + $0x8] sm:$0xf]
    %v175 = vunpack.c.l.b16 %v95
    %v176 = vunpack.c.l.b16 %v96
    %v177 = vpack.c.b16 %v176, %v175
    %v181 = vunpack.c.l.b16 %v170
    %v182 = vunpack.c.l.b16 %v171
    %v183 = vunpack.c.l.b16 %v172
    %v184 = vpack.c.b16 %v182, %v181
    %v185 = vpack.c.b16 %v183, %v183
    %187 = vrot.lane.b32.xlu0 %v106, 96
    %v188 = vpop.permute.xlu0 %187
    %vm190 = vcmask 195584
    %v192 = vsel %vm190, %v177, 0
    %vm194 = vcmask 1043456
    %v196 = vsel %vm194, %v185, 0
    %198 = vmatprep.subr.bf16.mxu0 0
    %199 = vmatpush1.bf16.msra.mxu0 0
    %200 = vmatprep.subr.bf16.mxu0 0
    %201 = vmatpush1.bf16.msra.mxu0 0
    %202 = vmatprep.subr.bf16.mxu0 0
    %203 = vmatpush1.bf16.msra.mxu0 0
    %204 = vmatprep.subr.bf16.mxu0 0
    %205 = vmatpush1.bf16.msra.mxu0 0
    %206 = vmatprep.subr.bf16.mxu0 0
    %207 = vmatpush1.bf16.msra.mxu0 0
    %208 = vmatprep.subr.bf16.mxu0 0
    %209 = vmatpush1.bf16.msra.mxu0 0
    %210 = vmatprep.subr.bf16.mxu0 0
    %211 = vmatpush1.bf16.msra.mxu0 %v196
    %212 = vmatprep.subr.bf16.mxu0 0
    %213 = vmatpush1.bf16.msra.mxu0 %v184
    %214 = vmatprep.subr.bf16.mxu0 0
    %215 = vmatpush2.bf16.msra.mxu0 0
    %216 = vmatprep.subr.bf16.mxu0 0
    %217 = vmatpush2.bf16.msra.mxu0 0
    %218 = vmatprep.subr.bf16.mxu0 0
    %219 = vmatpush2.bf16.msra.mxu0 0
    %220 = vmatprep.subr.bf16.mxu0 0
    %221 = vmatpush2.bf16.msra.mxu0 0
    %222 = vmatprep.subr.bf16.mxu0 0
    %223 = vmatpush2.bf16.msra.mxu0 0
    %224 = vmatprep.subr.bf16.mxu0 0
    %225 = vmatpush2.bf16.msra.mxu0 0
    %226 = vmatprep.subr.bf16.mxu0 0
    %227 = vmatpush2.bf16.msra.mxu0 0
    %228 = vmatprep.subr.bf16.mxu0 0
    %229 = vmatpush2.bf16.msra.mxu0 0
    %230 = vmatprep.mubr.bf16.mxu0 0
    %231 = vmatmul.mubr.bf16.gmra.mxu0 %v192
    %v232 = vpop.f32.mrf.mxu0
    %v233 = vadd.f32 %v188, %v232
    %v234 = vpop.f32.mrf.mxu0
    %v235 = vpop.f32.mrf.mxu0
    %v236 = vadd.f32 %v188, %v235
    %v237 = vpop.f32.mrf.mxu0
    %238 = vdwg.mxu0
    %v239 = vpack.c.bf16 %v167, %v164
    %v240 = vpack.c.bf16 %v236, %v233
    %v241 = vld [vmem:[#allocation7] sm:$0xf]
    %v242 = vunpack.c.l.bf16 %v241
    %v243 = vsub.f32 1.0, %v242
    %v244 = vmul.f32 %v243, -10000.0
    %vm245 = vcmask 130048
    %v247 = vsel %vm245, %v239, 0
    %v250 = vsel %vm245, %v240, 0
    %252 = vmatprep.subr.bf16.mxu0 0
    %253 = vmatpush1.bf16.xpose.msra.mxu0 0
    %254 = vmatprep.subr.bf16.mxu0 0
    %255 = vmatpush1.bf16.xpose.msra.mxu0 0
    %256 = vmatprep.subr.bf16.mxu0 0
    %257 = vmatpush1.bf16.xpose.msra.mxu0 0
    %258 = vmatprep.subr.bf16.mxu0 0
    %259 = vmatpush1.bf16.xpose.msra.mxu0 0
    %260 = vmatprep.subr.bf16.mxu0 0
    %261 = vmatpush1.bf16.xpose.msra.mxu0 0
    %262 = vmatprep.subr.bf16.mxu0 0
    %263 = vmatpush1.bf16.xpose.msra.mxu0 0
    %264 = vmatprep.subr.bf16.mxu0 0
    %265 = vmatpush1.bf16.xpose.msra.mxu0 0
    %266 = vmatprep.subr.bf16.mxu0 0
    %267 = vmatpush1.bf16.xpose.msra.mxu0 %v250
    %268 = vmatprep.subr.bf16.mxu0 0
    %269 = vmatpush2.bf16.xpose.msra.mxu0 0
    %270 = vmatprep.subr.bf16.mxu0 0
    %271 = vmatpush2.bf16.xpose.msra.mxu0 0
    %272 = vmatprep.subr.bf16.mxu0 0
    %273 = vmatpush2.bf16.xpose.msra.mxu0 0
    %274 = vmatprep.subr.bf16.mxu0 0
    %275 = vmatpush2.bf16.xpose.msra.mxu0 0
    %276 = vmatprep.subr.bf16.mxu0 0
    %277 = vmatpush2.bf16.xpose.msra.mxu0 0
    %278 = vmatprep.subr.bf16.mxu0 0
    %279 = vmatpush2.bf16.xpose.msra.mxu0 0
    %280 = vmatprep.subr.bf16.mxu0 0
    %281 = vmatpush2.bf16.xpose.msra.mxu0 0
    %282 = vmatprep.subr.bf16.mxu0 0
    %283 = vmatpush2.bf16.xpose.msra.mxu0 0
    %284 = vmatprep.mubr.bf16.mxu0 0
    %285 = vmatmul.mubr.bf16.gmra.mxu0 %v247
    %v286 = vpop.f32.mrf.mxu0
    %v287 = vadd.f32 %v244, %v286
    %v288 = vpop.f32.mrf.mxu0
    %v289 = vpop.f32.mrf.mxu0
    %v290 = vpop.f32.mrf.mxu0
    %291 = vdwg.mxu0
    %vm292 = vcmask 64512
    %v293 = vsel %vm292, %v287, -inf
    %294 = vmax.xlane.f32.xlu0 %v293
    %v295 = vpop.xlane.xlu0 %294
    %v296 = vsub.f32 %v287, %v295
    %v297 = vmul.f32 %v296, 1.442695
    %v298 = vpow.pop %v297
    %v299 = vsel %vm292, %v298, 0.0
    %300 = vadd.xlane.f32.xlu0 %v299
    %v301 = vpop.xlane.xlu0 %300
    %v302 = vrcp.pop %v301
    %v303 = vmul.f32 %v298, %v302
    %v304 = vpack.c.bf16 %v303, %v303
    %306 = vrot.lane.b32.xlu0 %v240, 96
    %v307 = vpop.permute.xlu0 %306
    %v309 = vsel %vm292, %v304, 0
    %v312 = vsel %vm194, %v307, 0
    %314 = vmatprep.subr.bf16.mxu0 0
    %315 = vmatpush1.bf16.msra.mxu0 0
    %316 = vmatprep.subr.bf16.mxu0 0
    %317 = vmatpush1.bf16.msra.mxu0 0
    %318 = vmatprep.subr.bf16.mxu0 0
    %319 = vmatpush1.bf16.msra.mxu0 0
    %320 = vmatprep.subr.bf16.mxu0 0
    %321 = vmatpush1.bf16.msra.mxu0 0
    %322 = vmatprep.subr.bf16.mxu0 0
    %323 = vmatpush1.bf16.msra.mxu0 0
    %324 = vmatprep.subr.bf16.mxu0 0
    %325 = vmatpush1.bf16.msra.mxu0 0
    %326 = vmatprep.subr.bf16.mxu0 0
    %327 = vmatpush1.bf16.msra.mxu0 0
    %328 = vmatprep.subr.bf16.mxu0 0
    %329 = vmatpush1.bf16.msra.mxu0 %v312
    %330 = vmatprep.subr.bf16.mxu0 0
    %331 = vmatpush2.bf16.msra.mxu0 0
    %332 = vmatprep.subr.bf16.mxu0 0
    %333 = vmatpush2.bf16.msra.mxu0 0
    %334 = vmatprep.subr.bf16.mxu0 0
    %335 = vmatpush2.bf16.msra.mxu0 0
    %336 = vmatprep.subr.bf16.mxu0 0
    %337 = vmatpush2.bf16.msra.mxu0 0
    %338 = vmatprep.subr.bf16.mxu0 0
    %339 = vmatpush2.bf16.msra.mxu0 0
    %340 = vmatprep.subr.bf16.mxu0 0
    %341 = vmatpush2.bf16.msra.mxu0 0
    %342 = vmatprep.subr.bf16.mxu0 0
    %343 = vmatpush2.bf16.msra.mxu0 0
    %344 = vmatprep.subr.bf16.mxu0 0
    %345 = vmatpush2.bf16.msra.mxu0 0
    %346 = vmatprep.mubr.bf16.mxu0 0
    %347 = vmatmul.mubr.bf16.gmra.mxu0 %v309
    %v348 = vpop.f32.mrf.mxu0
    %v349 = vadd.f32 0.0, %v348
    %v350 = vpop.f32.mrf.mxu0
    %v351 = vpop.f32.mrf.mxu0
    %v352 = vpop.f32.mrf.mxu0
    %353 = vdwg.mxu0
    %355 = vrot.lane.b32.xlu0 %v239, 112
    %v356 = vpop.permute.xlu0 %355
    %357 = vrot.lane.b32.xlu0 %v240, 112
    %v358 = vpop.permute.xlu0 %357
    %v360 = vsel %vm245, %v356, 0
    %v363 = vsel %vm245, %v358, 0
    %365 = vmatprep.subr.bf16.mxu0 0
    %366 = vmatpush1.bf16.xpose.msra.mxu0 0
    %367 = vmatprep.subr.bf16.mxu0 0
    %368 = vmatpush1.bf16.xpose.msra.mxu0 0
    %369 = vmatprep.subr.bf16.mxu0 0
    %370 = vmatpush1.bf16.xpose.msra.mxu0 0
    %371 = vmatprep.subr.bf16.mxu0 0
    %372 = vmatpush1.bf16.xpose.msra.mxu0 0
    %373 = vmatprep.subr.bf16.mxu0 0
    %374 = vmatpush1.bf16.xpose.msra.mxu0 0
    %375 = vmatprep.subr.bf16.mxu0 0
    %376 = vmatpush1.bf16.xpose.msra.mxu0 0
    %377 = vmatprep.subr.bf16.mxu0 0
    %378 = vmatpush1.bf16.xpose.msra.mxu0 0
    %379 = vmatprep.subr.bf16.mxu0 0
    %380 = vmatpush1.bf16.xpose.msra.mxu0 %v363
    %381 = vmatprep.subr.bf16.mxu0 0
    %382 = vmatpush2.bf16.xpose.msra.mxu0 0
    %383 = vmatprep.subr.bf16.mxu0 0
    %384 = vmatpush2.bf16.xpose.msra.mxu0 0
    %385 = vmatprep.subr.bf16.mxu0 0
    %386 = vmatpush2.bf16.xpose.msra.mxu0 0
    %387 = vmatprep.subr.bf16.mxu0 0
    %388 = vmatpush2.bf16.xpose.msra.mxu0 0
    %389 = vmatprep.subr.bf16.mxu0 0
    %390 = vmatpush2.bf16.xpose.msra.mxu0 0
    %391 = vmatprep.subr.bf16.mxu0 0
    %392 = vmatpush2.bf16.xpose.msra.mxu0 0
    %393 = vmatprep.subr.bf16.mxu0 0
    %394 = vmatpush2.bf16.xpose.msra.mxu0 0
    %395 = vmatprep.subr.bf16.mxu0 0
    %396 = vmatpush2.bf16.xpose.msra.mxu0 0
    %397 = vmatprep.mubr.bf16.mxu0 0
    %398 = vmatmul.mubr.bf16.gmra.mxu0 %v360
    %v399 = vpop.f32.mrf.mxu0
    %v400 = vadd.f32 %v244, %v399
    %v401 = vpop.f32.mrf.mxu0
    %v402 = vpop.f32.mrf.mxu0
    %v403 = vpop.f32.mrf.mxu0
    %404 = vdwg.mxu0
    %v405 = vsel %vm292, %v400, -inf
    %406 = vmax.xlane.f32.xlu0 %v405
    %v407 = vpop.xlane.xlu0 %406
    %v408 = vsub.f32 %v400, %v407
    %v409 = vmul.f32 %v408, 1.442695
    %v410 = vpow.pop %v409
    %v411 = vsel %vm292, %v410, 0.0
    %412 = vadd.xlane.f32.xlu0 %v411
    %v413 = vpop.xlane.xlu0 %412
    %v414 = vrcp.pop %v413
    %v415 = vmul.f32 %v410, %v414
    %v416 = vpack.c.bf16 %v415, %v415
    %417 = vrot.lane.b32.xlu0 %v240, 80
    %v418 = vpop.permute.xlu0 %417
    %v420 = vsel %vm292, %v416, 0
    %v423 = vsel %vm194, %v418, 0
    %425 = vmatprep.subr.bf16.mxu0 0
    %426 = vmatpush1.bf16.msra.mxu0 0
    %427 = vmatprep.subr.bf16.mxu0 0
    %428 = vmatpush1.bf16.msra.mxu0 0
    %429 = vmatprep.subr.bf16.mxu0 0
    %430 = vmatpush1.bf16.msra.mxu0 0
    %431 = vmatprep.subr.bf16.mxu0 0
    %432 = vmatpush1.bf16.msra.mxu0 0
    %433 = vmatprep.subr.bf16.mxu0 0
    %434 = vmatpush1.bf16.msra.mxu0 0
    %435 = vmatprep.subr.bf16.mxu0 0
    %436 = vmatpush1.bf16.msra.mxu0 0
    %437 = vmatprep.subr.bf16.mxu0 0
    %438 = vmatpush1.bf16.msra.mxu0 0
    %439 = vmatprep.subr.bf16.mxu0 0
    %440 = vmatpush1.bf16.msra.mxu0 %v423
    %441 = vmatprep.subr.bf16.mxu0 0
    %442 = vmatpush2.bf16.msra.mxu0 0
    %443 = vmatprep.subr.bf16.mxu0 0
    %444 = vmatpush2.bf16.msra.mxu0 0
    %445 = vmatprep.subr.bf16.mxu0 0
    %446 = vmatpush2.bf16.msra.mxu0 0
    %447 = vmatprep.subr.bf16.mxu0 0
    %448 = vmatpush2.bf16.msra.mxu0 0
    %449 = vmatprep.subr.bf16.mxu0 0
    %450 = vmatpush2.bf16.msra.mxu0 0
    %451 = vmatprep.subr.bf16.mxu0 0
    %452 = vmatpush2.bf16.msra.mxu0 0
    %453 = vmatprep.subr.bf16.mxu0 0
    %454 = vmatpush2.bf16.msra.mxu0 0
    %455 = vmatprep.subr.bf16.mxu0 0
    %456 = vmatpush2.bf16.msra.mxu0 0
    %457 = vmatprep.mubr.bf16.mxu0 0
    %458 = vmatmul.mubr.bf16.gmra.mxu0 %v420
    %v459 = vpop.f32.mrf.mxu0
    %v460 = vadd.f32 0.0, %v459
    %v461 = vpop.f32.mrf.mxu0
    %v462 = vpop.f32.mrf.mxu0
    %v463 = vpop.f32.mrf.mxu0
    %464 = vdwg.mxu0
    %466 = vrot.lane.b32.xlu0 %v460, 16
    %v467 = vpop.permute.xlu0 %466
    %v469 = vsel %vm245, %v349, %v467
    %470 = vst.msk [vmem:[#allocation11] sm:$0xff] %vm125, %v469
    %s471 = scalar_lea.vmem [#allocation7], 4
    %v472 = vld [vmem:[%s471] sm:$0xf]
    %v473 = vunpack.c.l.bf16 %v472
    %v474 = vsub.f32 1.0, %v473
    %v475 = vmul.f32 %v474, -10000.0
    %v476 = vrot.slane %v239, 4
    %v477 = vrot.slane %v240, 4
    %v479 = vsel %vm245, %v476, 0
    %v482 = vsel %vm245, %v477, 0
    %484 = vmatprep.subr.bf16.mxu0 0
    %485 = vmatpush1.bf16.xpose.msra.mxu0 0
    %486 = vmatprep.subr.bf16.mxu0 0
    %487 = vmatpush1.bf16.xpose.msra.mxu0 0
    %488 = vmatprep.subr.bf16.mxu0 0
    %489 = vmatpush1.bf16.xpose.msra.mxu0 0
    %490 = vmatprep.subr.bf16.mxu0 0
    %491 = vmatpush1.bf16.xpose.msra.mxu0 0
    %492 = vmatprep.subr.bf16.mxu0 0
    %493 = vmatpush1.bf16.xpose.msra.mxu0 0
    %494 = vmatprep.subr.bf16.mxu0 0
    %495 = vmatpush1.bf16.xpose.msra.mxu0 0
    %496 = vmatprep.subr.bf16.mxu0 0
    %497 = vmatpush1.bf16.xpose.msra.mxu0 0
    %498 = vmatprep.subr.bf16.mxu0 0
    %499 = vmatpush1.bf16.xpose.msra.mxu0 %v482
    %500 = vmatprep.subr.bf16.mxu0 0
    %501 = vmatpush2.bf16.xpose.msra.mxu0 0
    %502 = vmatprep.subr.bf16.mxu0 0
    %503 = vmatpush2.bf16.xpose.msra.mxu0 0
    %504 = vmatprep.subr.bf16.mxu0 0
    %505 = vmatpush2.bf16.xpose.msra.mxu0 0
    %506 = vmatprep.subr.bf16.mxu0 0
    %507 = vmatpush2.bf16.xpose.msra.mxu0 0
    %508 = vmatprep.subr.bf16.mxu0 0
    %509 = vmatpush2.bf16.xpose.msra.mxu0 0
    %510 = vmatprep.subr.bf16.mxu0 0
    %511 = vmatpush2.bf16.xpose.msra.mxu0 0
    %512 = vmatprep.subr.bf16.mxu0 0
    %513 = vmatpush2.bf16.xpose.msra.mxu0 0
    %514 = vmatprep.subr.bf16.mxu0 0
    %515 = vmatpush2.bf16.xpose.msra.mxu0 0
    %516 = vmatprep.mubr.bf16.mxu0 0
    %517 = vmatmul.mubr.bf16.gmra.mxu0 %v479
    %v518 = vpop.f32.mrf.mxu0
    %v519 = vadd.f32 %v475, %v518
    %v520 = vpop.f32.mrf.mxu0
    %v521 = vpop.f32.mrf.mxu0
    %v522 = vpop.f32.mrf.mxu0
    %523 = vdwg.mxu0
    %v524 = vsel %vm292, %v519, -inf
    %525 = vmax.xlane.f32.xlu0 %v524
    %v526 = vpop.xlane.xlu0 %525
    %v527 = vsub.f32 %v519, %v526
    %v528 = vmul.f32 %v527, 1.442695
    %v529 = vpow.pop %v528
    %v530 = vsel %vm292, %v529, 0.0
    %531 = vadd.xlane.f32.xlu0 %v530
    %v532 = vpop.xlane.xlu0 %531
    %v533 = vrcp.pop %v532
    %v534 = vmul.f32 %v529, %v533
    %v535 = vpack.c.bf16 %v534, %v534
    %536 = vrot.lane.b32.xlu0 %v477, 96
    %v537 = vpop.permute.xlu0 %536
    %v539 = vsel %vm292, %v535, 0
    %v542 = vsel %vm194, %v537, 0
    %544 = vmatprep.subr.bf16.mxu0 0
    %545 = vmatpush1.bf16.msra.mxu0 0
    %546 = vmatprep.subr.bf16.mxu0 0
    %547 = vmatpush1.bf16.msra.mxu0 0
    %548 = vmatprep.subr.bf16.mxu0 0
    %549 = vmatpush1.bf16.msra.mxu0 0
    %550 = vmatprep.subr.bf16.mxu0 0
    %551 = vmatpush1.bf16.msra.mxu0 0
    %552 = vmatprep.subr.bf16.mxu0 0
    %553 = vmatpush1.bf16.msra.mxu0 0
    %554 = vmatprep.subr.bf16.mxu0 0
    %555 = vmatpush1.bf16.msra.mxu0 0
    %556 = vmatprep.subr.bf16.mxu0 0
    %557 = vmatpush1.bf16.msra.mxu0 0
    %558 = vmatprep.subr.bf16.mxu0 0
    %559 = vmatpush1.bf16.msra.mxu0 %v542
    %560 = vmatprep.subr.bf16.mxu0 0
    %561 = vmatpush2.bf16.msra.mxu0 0
    %562 = vmatprep.subr.bf16.mxu0 0
    %563 = vmatpush2.bf16.msra.mxu0 0
    %564 = vmatprep.subr.bf16.mxu0 0
    %565 = vmatpush2.bf16.msra.mxu0 0
    %566 = vmatprep.subr.bf16.mxu0 0
    %567 = vmatpush2.bf16.msra.mxu0 0
    %568 = vmatprep.subr.bf16.mxu0 0
    %569 = vmatpush2.bf16.msra.mxu0 0
    %570 = vmatprep.subr.bf16.mxu0 0
    %571 = vmatpush2.bf16.msra.mxu0 0
    %572 = vmatprep.subr.bf16.mxu0 0
    %573 = vmatpush2.bf16.msra.mxu0 0
    %574 = vmatprep.subr.bf16.mxu0 0
    %575 = vmatpush2.bf16.msra.mxu0 0
    %576 = vmatprep.mubr.bf16.mxu0 0
    %577 = vmatmul.mubr.bf16.gmra.mxu0 %v539
    %v578 = vpop.f32.mrf.mxu0
    %v579 = vadd.f32 0.0, %v578
    %v580 = vpop.f32.mrf.mxu0
    %v581 = vpop.f32.mrf.mxu0
    %v582 = vpop.f32.mrf.mxu0
    %583 = vdwg.mxu0
    %584 = vrot.lane.b32.xlu0 %v476, 112
    %v585 = vpop.permute.xlu0 %584
    %586 = vrot.lane.b32.xlu0 %v477, 112
    %v587 = vpop.permute.xlu0 %586
    %v589 = vsel %vm245, %v585, 0
    %v592 = vsel %vm245, %v587, 0
    %594 = vmatprep.subr.bf16.mxu0 0
    %595 = vmatpush1.bf16.xpose.msra.mxu0 0
    %596 = vmatprep.subr.bf16.mxu0 0
    %597 = vmatpush1.bf16.xpose.msra.mxu0 0
    %598 = vmatprep.subr.bf16.mxu0 0
    %599 = vmatpush1.bf16.xpose.msra.mxu0 0
    %600 = vmatprep.subr.bf16.mxu0 0
    %601 = vmatpush1.bf16.xpose.msra.mxu0 0
    %602 = vmatprep.subr.bf16.mxu0 0
    %603 = vmatpush1.bf16.xpose.msra.mxu0 0
    %604 = vmatprep.subr.bf16.mxu0 0
    %605 = vmatpush1.bf16.xpose.msra.mxu0 0
    %606 = vmatprep.subr.bf16.mxu0 0
    %607 = vmatpush1.bf16.xpose.msra.mxu0 0
    %608 = vmatprep.subr.bf16.mxu0 0
    %609 = vmatpush1.bf16.xpose.msra.mxu0 %v592
    %610 = vmatprep.subr.bf16.mxu0 0
    %611 = vmatpush2.bf16.xpose.msra.mxu0 0
    %612 = vmatprep.subr.bf16.mxu0 0
    %613 = vmatpush2.bf16.xpose.msra.mxu0 0
    %614 = vmatprep.subr.bf16.mxu0 0
    %615 = vmatpush2.bf16.xpose.msra.mxu0 0
    %616 = vmatprep.subr.bf16.mxu0 0
    %617 = vmatpush2.bf16.xpose.msra.mxu0 0
    %618 = vmatprep.subr.bf16.mxu0 0
    %619 = vmatpush2.bf16.xpose.msra.mxu0 0
    %620 = vmatprep.subr.bf16.mxu0 0
    %621 = vmatpush2.bf16.xpose.msra.mxu0 0
    %622 = vmatprep.subr.bf16.mxu0 0
    %623 = vmatpush2.bf16.xpose.msra.mxu0 0
    %624 = vmatprep.subr.bf16.mxu0 0
    %625 = vmatpush2.bf16.xpose.msra.mxu0 0
    %626 = vmatprep.mubr.bf16.mxu0 0
    %627 = vmatmul.mubr.bf16.gmra.mxu0 %v589
    %v628 = vpop.f32.mrf.mxu0
    %v629 = vadd.f32 %v475, %v628
    %v630 = vpop.f32.mrf.mxu0
    %v631 = vpop.f32.mrf.mxu0
    %v632 = vpop.f32.mrf.mxu0
    %633 = vdwg.mxu0
    %v634 = vsel %vm292, %v629, -inf
    %635 = vmax.xlane.f32.xlu0 %v634
    %v636 = vpop.xlane.xlu0 %635
    %v637 = vsub.f32 %v629, %v636
    %v638 = vmul.f32 %v637, 1.442695
    %v639 = vpow.pop %v638
    %v640 = vsel %vm292, %v639, 0.0
    %641 = vadd.xlane.f32.xlu0 %v640
    %v642 = vpop.xlane.xlu0 %641
    %v643 = vrcp.pop %v642
    %v644 = vmul.f32 %v639, %v643
    %v645 = vpack.c.bf16 %v644, %v644
    %646 = vrot.lane.b32.xlu0 %v477, 80
    %v647 = vpop.permute.xlu0 %646
    %v649 = vsel %vm292, %v645, 0
    %v652 = vsel %vm194, %v647, 0
    %654 = vmatprep.subr.bf16.mxu0 0
    %655 = vmatpush1.bf16.msra.mxu0 0
    %656 = vmatprep.subr.bf16.mxu0 0
    %657 = vmatpush1.bf16.msra.mxu0 0
    %658 = vmatprep.subr.bf16.mxu0 0
    %659 = vmatpush1.bf16.msra.mxu0 0
    %660 = vmatprep.subr.bf16.mxu0 0
    %661 = vmatpush1.bf16.msra.mxu0 0
    %662 = vmatprep.subr.bf16.mxu0 0
    %663 = vmatpush1.bf16.msra.mxu0 0
    %664 = vmatprep.subr.bf16.mxu0 0
    %665 = vmatpush1.bf16.msra.mxu0 0
    %666 = vmatprep.subr.bf16.mxu0 0
    %667 = vmatpush1.bf16.msra.mxu0 0
    %668 = vmatprep.subr.bf16.mxu0 0
    %669 = vmatpush1.bf16.msra.mxu0 %v652
    %670 = vmatprep.subr.bf16.mxu0 0
    %671 = vmatpush2.bf16.msra.mxu0 0
    %672 = vmatprep.subr.bf16.mxu0 0
    %673 = vmatpush2.bf16.msra.mxu0 0
    %674 = vmatprep.subr.bf16.mxu0 0
    %675 = vmatpush2.bf16.msra.mxu0 0
    %676 = vmatprep.subr.bf16.mxu0 0
    %677 = vmatpush2.bf16.msra.mxu0 0
    %678 = vmatprep.subr.bf16.mxu0 0
    %679 = vmatpush2.bf16.msra.mxu0 0
    %680 = vmatprep.subr.bf16.mxu0 0
    %681 = vmatpush2.bf16.msra.mxu0 0
    %682 = vmatprep.subr.bf16.mxu0 0
    %683 = vmatpush2.bf16.msra.mxu0 0
    %684 = vmatprep.subr.bf16.mxu0 0
    %685 = vmatpush2.bf16.msra.mxu0 0
    %686 = vmatprep.mubr.bf16.mxu0 0
    %687 = vmatmul.mubr.bf16.gmra.mxu0 %v649
    %v688 = vpop.f32.mrf.mxu0
    %v689 = vadd.f32 0.0, %v688
    %v690 = vpop.f32.mrf.mxu0
    %v691 = vpop.f32.mrf.mxu0
    %v692 = vpop.f32.mrf.mxu0
    %693 = vdwg.mxu0
    %695 = vrot.lane.b32.xlu0 %v689, 16
    %v696 = vpop.permute.xlu0 %695
    %v698 = vsel %vm245, %v579, %v696
    %s699 = scalar_lea.vmem [#allocation11], 8
    %700 = vst.msk [vmem:[%s699] sm:$0xff] %vm125, %v698
    // Predicated region
    $region46: #{tpu_custom_call.1} parent=1 // pred_check
      _
    $region47: #{tpu_custom_call.1} parent=1 // pred_check_branch
      %702 = sbr.rel (0) target = $region49
    $region48: #{tpu_custom_call.1} parent=1 // pred_region
      %s704 = ssub.s32 256, 256
      %705 = vsyncadd [#allocation4], %s704
      %s706 = sshll.u32 [#allocation11], 4
      %s707 = int_to_ptr.vmem [resolvable:$true] %s706
      %712 = dma.vmem_to_hbm [thread:$0]  %s707, 256, %s6, [#allocation4], 128, 128, 8
    $region49: #{tpu_custom_call.1} parent=1 // pred_fallthru
      _
    // Predicated region
    $region50: #{tpu_custom_call.1} parent=1 // pred_check
      _
    $region51: #{tpu_custom_call.1} parent=1 // pred_check_branch
      %714 = sbr.rel (0) target = $region53
    $region52: #{tpu_custom_call.1} parent=1 // pred_region
      %715 = dma.done [#allocation4], 256
    $region53: #{tpu_custom_call.1} parent=1 // pred_fallthru
      _
    %716 = vsyncpa [#allocation3], 1
    %717 = vsyncpa [#allocation6], 1
    %718 = vsyncpa [#allocation9], 1
    %719 = vsyncpa [#allocation4], 1

</llo_original>
